<compile_context>
chip_gen: v7x
topology: tpu7x:2x2x1
jax: 0.10.0
libtpu: 0.0.40
codegen_flags: <defaults>
</compile_context>

<pallas_src>
import functools

import jax
import jax.numpy as jnp
from jax.experimental import pallas as pl
from jax.experimental.pallas import tpu as pltpu

_IGNORE_INDEX = -100                       # PyTorch NLLLoss default
_VMEM_PER_BUFFER_BYTES = 2 * 1024 * 1024   # f32-equivalent bytes per x tile
_VMEM_LIMIT_BYTES = 32 * 1024 * 1024


def _nll_sum_lane_dense_kernel(x_ref, sel_lane_ref, out_ref, *,
                               n_flat_rows: int, tile_rows: int,
                               num_classes: int):
    """Lane-dense path.

    x_ref:        (tile_rows, 128) window of the flattened (N*C/128, 128)
                  log-prob array (native dtype, cast to f32 here).
    sel_lane_ref: (tile_rows, G) f32, G = 128 // C.  For each of the G
                  original rows packed into a flat row, the absolute lane
                  index that must be gathered ((row % G) * C + target), so
                  ignore_index / out-of-range targets never match any lane.
    out_ref:      (1, 8, 128) per-tile partial sum (splat of a scalar).
    """
    i = pl.program_id(0)
    g = sel_lane_ref.shape[1]                       # groups per flat row

    x = x_ref[...].astype(jnp.float32)              # (tile_rows, 128)
    sel_lane = sel_lane_ref[...]                    # (tile_rows, G) exact small ints

    # Replicate each group's selected-lane value across that group's C lanes
    # with a constant 0/1 matrix on the MXU (idle in this kernel):
    #   rep[g, l] = 1  iff lane l belongs to group g  (l in [g*C, (g+1)*C)).
    g_io = jax.lax.broadcasted_iota(jnp.int32, (g, 128), 0)
    l_io = jax.lax.broadcasted_iota(jnp.int32, (g, 128), 1)
    rep = ((l_io >= g_io * num_classes)
           & (l_io < (g_io + 1) * num_classes)).astype(jnp.float32)
    sel_lane_b = jnp.dot(sel_lane, rep,
                         preferred_element_type=jnp.float32)   # (tile_rows, 128)

    # Row validity handles the ragged last grid block (no wrapper-side pad):
    # out-of-bounds rows contain undefined data and are masked out here.
    row = jax.lax.broadcasted_iota(jnp.int32, (tile_rows, 1), 0) + i * tile_rows
    valid = row < n_flat_rows                       # (tile_rows, 1)

    lane = jax.lax.broadcasted_iota(jnp.int32, (tile_rows, 128), 1)
    sel = (lane.astype(jnp.float32) == sel_lane_b) & valid
    s = jnp.sum(jnp.where(sel, x, jnp.float32(0.0)))

    out_ref[...] = jnp.zeros((1, 8, 128), jnp.float32) + s


def _nll_sum_natural_kernel(x_ref, tgt_ref, out_ref, *,
                            n_rows: int, tile_rows: int):
    """Fallback natural-layout path: (tile_rows, C) blocks, targets (tile_rows, 1)."""
    i = pl.program_id(0)
    x = x_ref[...].astype(jnp.float32)              # (tile_rows, C)
    tgt = tgt_ref[...]                              # (tile_rows, 1) int32

    row = jax.lax.broadcasted_iota(jnp.int32, (tile_rows, 1), 0) + i * tile_rows
    valid = row < n_rows                            # masks the ragged last block

    col = jax.lax.broadcasted_iota(jnp.int32, x.shape, 1)
    sel = (col == tgt) & valid                      # ignore_index(-100) never matches
    s = jnp.sum(jnp.where(sel, x, jnp.float32(0.0)))

    out_ref[...] = jnp.zeros((1, 8, 128), jnp.float32) + s


def _pick_tile_rows(total_rows: int, lane_width_padded: int, forced=None) -> int:
    """Rows per grid step.  Sized from real VMEM bytes (lane-padded width) so
    each step moves MiB-scale data; full extent if the array is small."""
    if forced is None:
        rows = _VMEM_PER_BUFFER_BYTES // (lane_width_padded * 4)
        rows = max(8, (rows // 8) * 8)              # sublane aligned
    else:
        rows = forced                               # test hook; multiple of 8
    if rows >= total_rows:
        return total_rows                           # full dim: always legal
    return rows                                     # multiple of 8, ragged tail OK


def adversarial_loss(loss_ch, loss_cp, log_probs, target, *, lambda_adv,
                     _force_tile_rows=None):
    """loss_ch, loss_cp: scalars; log_probs: (N, C) log-probs; target: (N,) int."""
    n, c = log_probs.shape
    target = target.astype(jnp.int32)

    # NLLLoss 'mean' denominator: number of non-ignored rows.  Tiny O(N)
    # target-vector op, kept in the XLA wrapper (kernel only produces sums).
    n_valid = jnp.sum((target != _IGNORE_INDEX).astype(jnp.float32))

    compiler_params = pltpu.CompilerParams(
        dimension_semantics=("parallel",),   # independent per-tile partials ->
                                             # v7x megacore splits the sweep
        vmem_limit_bytes=_VMEM_LIMIT_BYTES)

    lane_dense = (c <= 128) and (128 % c == 0) and (n % (128 // c) == 0)

    if lane_dense:
        g = 128 // c                          # original rows per 128-lane flat row
        m = n // g                            # flat rows
        xf = log_probs.reshape(m, 128)        # free reshape (contiguous row-major)
        # Absolute selected lane per original row inside its flat row.
        sel_lane = ((jnp.arange(n, dtype=jnp.int32) % g) * c + target)
        sel_lane = sel_lane.astype(jnp.float32).reshape(m, g)

        tile_rows = _pick_tile_rows(m, 128, _force_tile_rows)
        num_tiles = pl.cdiv(m, tile_rows)
        kernel = functools.partial(_nll_sum_lane_dense_kernel,
                                   n_flat_rows=m, tile_rows=tile_rows,
                                   num_classes=c)
        partials = pl.pallas_call(
            kernel,
            out_shape=jax.ShapeDtypeStruct((num_tiles, 8, 128), jnp.float32),
            grid=(num_tiles,),
            in_specs=[
                pl.BlockSpec((tile_rows, 128), lambda i: (i, 0)),   # log-probs
                pl.BlockSpec((tile_rows, g), lambda i: (i, 0)),     # selected lanes
            ],
            out_specs=pl.BlockSpec((1, 8, 128), lambda i: (i, 0, 0)),
            compiler_params=compiler_params,
        )(xf, sel_lane)
    else:
        lane_padded = ((c + 127) // 128) * 128
        tile_rows = _pick_tile_rows(n, lane_padded, _force_tile_rows)
        num_tiles = pl.cdiv(n, tile_rows)
        kernel = functools.partial(_nll_sum_natural_kernel,
                                   n_rows=n, tile_rows=tile_rows)
        partials = pl.pallas_call(
            kernel,
            out_shape=jax.ShapeDtypeStruct((num_tiles, 8, 128), jnp.float32),
            grid=(num_tiles,),
            in_specs=[
                pl.BlockSpec((tile_rows, c), lambda i: (i, 0)),     # log-probs
                pl.BlockSpec((tile_rows, 1), lambda i: (i, 0)),     # targets
            ],
            out_specs=pl.BlockSpec((1, 8, 128), lambda i: (i, 0, 0)),
            compiler_params=compiler_params,
        )(log_probs, target.reshape(n, 1))

    # Scalar finalization in the wrapper (per review): cross-tile sum, mean,
    # lambda_adv scaling and the + loss_ch + loss_cp.
    total = jnp.sum(partials[:, 0, 0])
    nll = -total / n_valid                    # NaN if all rows ignored (PyTorch-like)
    return (jnp.asarray(loss_ch, jnp.float32)
            + jnp.asarray(loss_cp, jnp.float32)
            + jnp.float32(lambda_adv) * nll)


if __name__ == "__main__":
    key = jax.random.PRNGKey(0)
    keys = jax.random.split(key, 8)
    LAMBDA_ADV = 0.5

    loss_ch = jax.random.uniform(keys[0], (), dtype=jnp.float32)
    loss_cp = jax.random.uniform(keys[1], (), dtype=jnp.float32)

    def reference(lch, lcp, lp, tg):
        lp32 = lp.astype(jnp.float32)
        nll = -jnp.mean(jnp.take_along_axis(lp32, tg[:, None], axis=1))
        return lch + lcp + LAMBDA_ADV * nll

    # Case 1: lane-dense path (C divides 128), single tile.  N=8, C=32.
    n1, c1 = 8, 32
    lp1 = jax.nn.log_softmax(
        jax.random.normal(keys[2], (n1, c1), dtype=jnp.float32), axis=-1)
    tg1 = jax.random.randint(keys[3], (n1,), 0, c1, dtype=jnp.int32)
    out1 = jax.block_until_ready(
        adversarial_loss(loss_ch, loss_cp, lp1, tg1, lambda_adv=LAMBDA_ADV))
    ref1 = reference(loss_ch, loss_cp, lp1, tg1)
    assert jnp.allclose(out1, ref1, rtol=1e-5, atol=1e-5), (out1, ref1)

    # Case 2: lane-dense path, multi-tile grid with a ragged last block
    # (N=88, C=16 -> 11 flat rows, forced 8-row tiles -> grid=(2,), tail of 3).
    n2, c2 = 88, 16
    lp2 = jax.nn.log_softmax(
        jax.random.normal(keys[4], (n2, c2), dtype=jnp.float32), axis=-1)
    tg2 = jax.random.randint(keys[5], (n2,), 0, c2, dtype=jnp.int32)
    out2 = jax.block_until_ready(
        adversarial_loss(loss_ch, loss_cp, lp2, tg2, lambda_adv=LAMBDA_ADV,
                         _force_tile_rows=8))
    ref2 = reference(loss_ch, loss_cp, lp2, tg2)
    assert jnp.allclose(out2, ref2, rtol=1e-5, atol=1e-5), (out2, ref2)

    # Case 3: natural-layout fallback (C does not divide 128), ragged last
    # block, bf16 input DMA'd without any wrapper-side f32 copy.
    n3, c3 = 50, 10
    lp3 = jax.nn.log_softmax(
        jax.random.normal(keys[6], (n3, c3), dtype=jnp.float32),
        axis=-1).astype(jnp.bfloat16)
    tg3 = jax.random.randint(keys[7], (n3,), 0, c3, dtype=jnp.int32)
    out3 = jax.block_until_ready(
        adversarial_loss(loss_ch, loss_cp, lp3, tg3, lambda_adv=LAMBDA_ADV,
                         _force_tile_rows=16))
    ref3 = reference(loss_ch, loss_cp, lp3, tg3)
    assert jnp.allclose(out3, ref3, rtol=1e-4, atol=1e-4), (out3, ref3)

    print("KERNEL_OK")
</pallas_src>

<mosaic_0001>
module attributes {stable_mosaic.version = 11 : i64} {
  func.func @_nll_sum_lane_dense_kernel(%arg0: i32, %arg1: memref<2x128xf32, #tpu.memory_space<vmem>>, %arg2: memref<2x4xf32, #tpu.memory_space<vmem>>, %arg3: memref<1x8x128xf32, #tpu.memory_space<vmem>>) attributes {dimension_semantics = [#tpu.dimension_semantics<parallel>], iteration_bounds = array<i64: 1>, scalar_prefetch = 0 : i64, scratch_operands = 0 : i64, tpu.core_type = #tpu.core_type<tc>, window_params = [{transform_indices = @transform_0, window_bounds = array<i64: 2, 128>}, {transform_indices = @transform_1, window_bounds = array<i64: 2, 4>}, {transform_indices = @transform_2, window_bounds = array<i64: 1, 8, 128>}]} {
    %c0 = arith.constant 0 : index
    %c0_0 = arith.constant 0 : index
    %0 = vector.load %arg1[%c0, %c0_0] : memref<2x128xf32, #tpu.memory_space<vmem>>, vector<2x128xf32>
    %c0_1 = arith.constant 0 : index
    %c0_2 = arith.constant 0 : index
    %1 = vector.load %arg2[%c0_1, %c0_2] : memref<2x4xf32, #tpu.memory_space<vmem>>, vector<2x4xf32>
    %2 = tpu.iota {dimensions = array<i32: 0>} : vector<4x128xi32>
    %3 = tpu.iota {dimensions = array<i32: 1>} : vector<4x128xi32>
    %c32_i32 = arith.constant 32 : i32
    %4 = vector.broadcast %c32_i32 : i32 to vector<4x128xi32>
    %5 = arith.muli %2, %4 : vector<4x128xi32>
    %6 = arith.cmpi sge, %3, %5 : vector<4x128xi32>
    %c1_i32 = arith.constant 1 : i32
    %7 = vector.broadcast %c1_i32 : i32 to vector<4x128xi32>
    %8 = arith.addi %2, %7 : vector<4x128xi32>
    %c32_i32_3 = arith.constant 32 : i32
    %9 = vector.broadcast %c32_i32_3 : i32 to vector<4x128xi32>
    %10 = arith.muli %8, %9 : vector<4x128xi32>
    %11 = arith.cmpi slt, %3, %10 : vector<4x128xi32>
    %12 = arith.andi %6, %11 : vector<4x128xi1>
    %13 = arith.extui %12 : vector<4x128xi1> to vector<4x128xi32>
    %14 = arith.sitofp %13 : vector<4x128xi32> to vector<4x128xf32>
    %cst = arith.constant dense<0.000000e+00> : vector<2x128xf32>
    %15 = tpu.matmul %1, %14, %cst {dimension_numbers = #tpu.dot_dimension_numbers<[1], [0], [0], [1], [0, 0, 1, 1], [], []>} : vector<2x4xf32>, vector<4x128xf32>, vector<2x128xf32> -> vector<2x128xf32>
    %16 = tpu.iota {dimensions = array<i32: 0>} : vector<2x1xi32>
    %c2_i32 = arith.constant 2 : i32
    %17 = arith.muli %arg0, %c2_i32 : i32
    %18 = vector.broadcast %17 : i32 to vector<2x1xi32>
    %19 = arith.addi %16, %18 : vector<2x1xi32>
    %c2_i32_4 = arith.constant 2 : i32
    %20 = vector.broadcast %c2_i32_4 : i32 to vector<2x1xi32>
    %21 = arith.cmpi slt, %19, %20 : vector<2x1xi32>
    %22 = tpu.iota {dimensions = array<i32: 1>} : vector<2x128xi32>
    %23 = arith.sitofp %22 : vector<2x128xi32> to vector<2x128xf32>
    %24 = arith.cmpf oeq, %23, %15 : vector<2x128xf32>
    %25 = vector.broadcast %21 : vector<2x1xi1> to vector<2x128xi1>
    %26 = arith.andi %24, %25 : vector<2x128xi1>
    %cst_5 = arith.constant 0.000000e+00 : f32
    %27 = vector.broadcast %cst_5 : f32 to vector<2x128xf32>
    %28 = arith.select %26, %0, %27 : vector<2x128xi1>, vector<2x128xf32>
    %29 = vector.shape_cast %28 : vector<2x128xf32> to vector<1x2x128xf32>
    %cst_6 = arith.constant dense<0.000000e+00> : vector<1xf32>
    %30 = vector.multi_reduction <add>, %29, %cst_6 [1, 2] : vector<1x2x128xf32> to vector<1xf32>
    %31 = vector.shape_cast %30 : vector<1xf32> to vector<1x1x1xf32>
    %32 = vector.extract %31[0, 0, 0] : f32 from vector<1x1x1xf32>
    %cst_7 = arith.constant 0.000000e+00 : f32
    %33 = vector.broadcast %cst_7 : f32 to vector<1x8x128xf32>
    %34 = vector.broadcast %32 : f32 to vector<1x8x128xf32>
    %35 = arith.addf %33, %34 : vector<1x8x128xf32>
    %c0_8 = arith.constant 0 : index
    %c0_9 = arith.constant 0 : index
    %c0_10 = arith.constant 0 : index
    %36 = vector.load %arg3[%c0_8, %c0_9, %c0_10] : memref<1x8x128xf32, #tpu.memory_space<vmem>>, vector<1x8x128xf32>
    tpu.vector_store %arg3[%c0_8, %c0_9, %c0_10], %35 {strides = array<i32>} : memref<1x8x128xf32, #tpu.memory_space<vmem>>, vector<1x8x128xf32>,
    return
  }
  func.func @transform_0(%arg0: i32) -> (i32, i32) {
    %c0_i32 = arith.constant 0 : i32
    %c0_i32_0 = arith.constant 0 : i32
    return %arg0, %c0_i32 : i32, i32
  }
  func.func @transform_1(%arg0: i32) -> (i32, i32) {
    %c0_i32 = arith.constant 0 : i32
    %c0_i32_0 = arith.constant 0 : i32
    return %arg0, %c0_i32 : i32, i32
  }
  func.func @transform_2(%arg0: i32) -> (i32, i32, i32) {
    %c0_i32 = arith.constant 0 : i32
    %c0_i32_0 = arith.constant 0 : i32
    %c0_i32_1 = arith.constant 0 : i32
    return %arg0, %c0_i32, %c0_i32_0 : i32, i32, i32
  }
}

</mosaic_0001>

<llo_original>
// kernel: tpu_custom_call.1
$region0: #{tpu_custom_call.1}
  #allocation0 [shape = 'u32[]', space=smem, size = 0x4, offset = 0x4, fixed_abs, tag = 'smem constant byte address 0x4 - core index']
  #allocation1 [shape = 'u32[144,128]{1,0:T(1,128)}', space=vmem, size = 0x12000, scoped, tag = 'internal scratch']
  %s0 = inlined_call_operand.hbm [shape: f32[2,128], index: 0, kind: input, shape index: {}]
  %s1 = inlined_call_operand.vmem [shape: f32[2,4], index: 1, kind: input, shape index: {}]
  %s2 = inlined_call_operand.hbm [shape: f32[1,8,128], index: 2, kind: output, shape index: {}]
  %s3 = sld [smem:[#allocation0]]
  $region22: #{tpu_custom_call.1} parent=0
    _
  %s5 = ssub.s32 1, %s3
  %s6 = scalar_select 0, %s5, %s3
  $region1: #{tpu_custom_call.1} parent=0
    #allocation2 [shape = 'u8[1024]{0}', space=vmem, size = 0x400, scoped, tag = 'input window, operand 0, single buffered']
    #allocation3 [shape = 's32[1]{0}', space=sflag, size = 0x4, scoped, tag = 'scoped memory for tpu_custom_call.1']
    #allocation4 [shape = 's32[1]{0}', space=sflag, size = 0x4, scoped, tag = 'scoped memory for tpu_custom_call.1']
    #allocation5 [shape = 'u8[4096]{0}', space=vmem, size = 0x1000, scoped, tag = 'output window, operand 0, single buffered']
    %7 = vsyncpa [#allocation3], 0
    %8 = vsyncpa [#allocation4], 0
    // Predicated region
    $region2: #{tpu_custom_call.1} parent=1 // pred_check
      _
    $region3: #{tpu_custom_call.1} parent=1 // pred_check_branch
      %10 = sbr.rel (0) target = $region5
    $region4: #{tpu_custom_call.1} parent=1 // pred_region
      %s12 = ssub.s32 32, 32
      %13 = vsyncadd [#allocation3], %s12
      %s15 = sshll.u32 [#allocation2], 4
      %s16 = int_to_ptr.vmem [resolvable:$true] %s15
      %18 = dma.hbm_to_vmem [thread:$0]  %s0, 32, %s16, [#allocation3]
    $region5: #{tpu_custom_call.1} parent=1 // pred_fallthru
      _
    // Predicated region
    $region6: #{tpu_custom_call.1} parent=1 // pred_check
      _
    $region7: #{tpu_custom_call.1} parent=1 // pred_check_branch
      %20 = sbr.rel (0) target = $region9
    $region8: #{tpu_custom_call.1} parent=1 // pred_region
      _
    $region9: #{tpu_custom_call.1} parent=1 // pred_fallthru
      _
    // Predicated region
    $region10: #{tpu_custom_call.1} parent=1 // pred_check
      _
    $region11: #{tpu_custom_call.1} parent=1 // pred_check_branch
      %22 = sbr.rel (0) target = $region13
    $region12: #{tpu_custom_call.1} parent=1 // pred_region
      %23 = dma.done [#allocation3], 32
    $region13: #{tpu_custom_call.1} parent=1 // pred_fallthru
      _
    %v24 = vld [vmem:[#allocation2] sm:$0x3]
    %v25 = vld [vmem:[%s1] sm:$0x3]
    %v26 = vlaneseq
    %v27 = vshrl.u32 %v26, 7
    %v28 = vlaneseq
    %v29 = vand.u32 %v28, 127
    %v30 = vmul.u32 %v27, 32
    %vm31 = vcmp.ge.s32.totalorder %v29, %v30
    %v32 = vadd.s32 %v27, 1
    %v33 = vmul.u32 %v32, 32
    %vm34 = vcmp.lt.s32.totalorder %v29, %v33
    %vm35 = vmand %vm31, %vm34
    %v36 = vsel %vm35, 1, 0
    %v37 = vcvt.s32.f32 %v36
    %vm38 = vcmask 31744
    %v40 = vsel %vm38, %v25, 0
    %vm42 = vcmask 1043456
    %v44 = vsel %vm42, %v37, 0
    %46 = vmatprep.subr.mxu0 0.0
    %47 = vmatpush1.msra.mxu0 %v44
    %48 = vmatprep.subr.mxu0 0.0
    %49 = vmatpush1.msra.mxu0 0.0
    %50 = vmatprep.subr.mxu0 0.0
    %51 = vmatpush1.msra.mxu0 0.0
    %52 = vmatprep.subr.mxu0 0.0
    %53 = vmatpush1.msra.mxu0 0.0
    %54 = vmatprep.subr.mxu0 0.0
    %55 = vmatpush1.msra.mxu0 0.0
    %56 = vmatprep.subr.mxu0 0.0
    %57 = vmatpush1.msra.mxu0 0.0
    %58 = vmatprep.subr.mxu0 0.0
    %59 = vmatpush1.msra.mxu0 0.0
    %60 = vmatprep.subr.mxu0 0.0
    %61 = vmatpush1.msra.mxu0 0.0
    %62 = vmatprep.subr.mxu0 0.0
    %63 = vmatpush1.msra.mxu0 0.0
    %64 = vmatprep.subr.mxu0 0.0
    %65 = vmatpush1.msra.mxu0 0.0
    %66 = vmatprep.subr.mxu0 0.0
    %67 = vmatpush1.msra.mxu0 0.0
    %68 = vmatprep.subr.mxu0 0.0
    %69 = vmatpush1.msra.mxu0 0.0
    %70 = vmatprep.subr.mxu0 0.0
    %71 = vmatpush1.msra.mxu0 0.0
    %72 = vmatprep.subr.mxu0 0.0
    %73 = vmatpush1.msra.mxu0 0.0
    %74 = vmatprep.subr.mxu0 0.0
    %75 = vmatpush1.msra.mxu0 0.0
    %76 = vmatprep.subr.mxu0 0.0
    %77 = vmatpush1.msra.mxu0 0.0
    %78 = vmatprep.subr.mxu0 0.0
    %79 = vmatpush1.msra.mxu0 0.0
    %80 = vmatprep.subr.mxu0 0.0
    %81 = vmatpush1.msra.mxu0 0.0
    %82 = vmatprep.subr.mxu0 0.0
    %83 = vmatpush1.msra.mxu0 0.0
    %84 = vmatprep.subr.mxu0 0.0
    %85 = vmatpush1.msra.mxu0 0.0
    %86 = vmatprep.subr.mxu0 0.0
    %87 = vmatpush1.msra.mxu0 0.0
    %88 = vmatprep.subr.mxu0 0.0
    %89 = vmatpush1.msra.mxu0 0.0
    %90 = vmatprep.subr.mxu0 0.0
    %91 = vmatpush1.msra.mxu0 0.0
    %92 = vmatprep.subr.mxu0 0.0
    %93 = vmatpush1.msra.mxu0 0.0
    %94 = vmatprep.subr.mxu0 0.0
    %95 = vmatpush1.msra.mxu0 0.0
    %96 = vmatprep.subr.mxu0 0.0
    %97 = vmatpush1.msra.mxu0 0.0
    %98 = vmatprep.subr.mxu0 0.0
    %99 = vmatpush1.msra.mxu0 0.0
    %100 = vmatprep.subr.mxu0 0.0
    %101 = vmatpush1.msra.mxu0 0.0
    %102 = vmatprep.subr.mxu0 0.0
    %103 = vmatpush1.msra.mxu0 0.0
    %104 = vmatprep.subr.mxu0 0.0
    %105 = vmatpush1.msra.mxu0 0.0
    %106 = vmatprep.subr.mxu0 0.0
    %107 = vmatpush1.msra.mxu0 0.0
    %108 = vmatprep.subr.mxu0 0.0
    %109 = vmatpush1.msra.mxu0 0.0
    %110 = vmatprep.mubr.f32.mxu0 0.0
    %111 = vmatmul.mubr.f32.gmra.mrb[0].mxu0 %v40
    %v112 = vpop.f32.mrb[0].mxu0
    %v113 = vadd.f32 0.0, %v112
    %v114 = vpop.f32.mrb[0].mxu0
    %115 = vdwg.mxu0
    %s116 = smul.u32 0, 2
    %v117 = vstv %s116
    %v118 = vadd.s32 %v27, %v117
    %vm119 = vcmp.lt.s32.totalorder %v118, 2
    %v120 = vcvt.s32.f32 %v29
    %vm121 = vcmp.eq.f32.partialorder %v120, %v113
    %v122 = vsel %vm119, 1, 0
    %vm123 = vcmp.eq.s32.totalorder %v122, 1
    %vm124 = vmand %vm121, %vm123
    %v125 = vsel %vm124, %v24, 0.0
    %vm126 = vcmask 1041408
    %v127 = vsel %vm126, %v125, 0.0
    %128 = vadd.xlane.f32.xlu0 %v127
    %v129 = vpop.xlane.xlu0 %128
    %v130 = vrot.slane %v129, 4
    %v131 = vadd.f32 %v129, %v130
    %v132 = vrot.slane %v131, 2
    %v133 = vadd.f32 %v131, %v132
    %v134 = vrot.slane %v133, 1
    %v135 = vadd.f32 %v133, %v134
    %s136 = vtos %v135
    %v137 = vstv %s136
    %v138 = vadd.f32 %v137, 0.0
    %139 = vst [vmem:[#allocation5] sm:$0xff] %v138
    // Predicated region
    $region14: #{tpu_custom_call.1} parent=1 // pred_check
      _
    $region15: #{tpu_custom_call.1} parent=1 // pred_check_branch
      %141 = sbr.rel (0) target = $region17
    $region16: #{tpu_custom_call.1} parent=1 // pred_region
      %s143 = ssub.s32 128, 128
      %144 = vsyncadd [#allocation4], %s143
      %s146 = sshll.u32 [#allocation5], 4
      %s147 = int_to_ptr.vmem [resolvable:$true] %s146
      %149 = dma.vmem_to_hbm [thread:$0]  %s147, 128, %s2, [#allocation4]
    $region17: #{tpu_custom_call.1} parent=1 // pred_fallthru
      _
    // Predicated region
    $region18: #{tpu_custom_call.1} parent=1 // pred_check
      _
    $region19: #{tpu_custom_call.1} parent=1 // pred_check_branch
      %151 = sbr.rel (0) target = $region21
    $region20: #{tpu_custom_call.1} parent=1 // pred_region
      %152 = dma.done [#allocation4], 128
    $region21: #{tpu_custom_call.1} parent=1 // pred_fallthru
      _
    %153 = vsyncpa [#allocation3], 1
    %154 = vsyncpa [#allocation4], 1

</llo_original>
